<compile_context>
chip_gen: v7x
topology: tpu7x:2x2x1
jax: 0.10.0
libtpu: 0.0.40
codegen_flags: <defaults>
</compile_context>

<pallas_src>
import functools

import jax
import jax.numpy as jnp
from jax.experimental import pallas as pl
from jax.experimental.pallas import tpu as pltpu


NEG_SLOPE = 0.01  # F.leaky_relu default negative_slope

_LANE = 128      # lane width (last dim tiling)
_SUBLANE = 8     # sublane width (second-to-last dim tiling, f32)


def _round_up(n, m):
    return ((n + m - 1) // m) * m


def _fused_mlp_kernel(*refs):
    """refs = (x_ref, w0_ref, ..., wL_ref, o_ref); all padded, VMEM-resident.

    Computes h = leaky_relu(h @ Wt) for every layer with the running
    activation kept on-chip; only the final activation is stored (lane-dense).
    """
    x_ref = refs[0]
    w_refs = refs[1:-1]
    o_ref = refs[-1]

    h = x_ref[...]
    # Static Python loop: layer count/shapes are compile-time constants, so
    # this fully unrolls into back-to-back MXU matmuls + VPU selects.
    for w_ref in w_refs:
        y = jnp.dot(h, w_ref[...], preferred_element_type=jnp.float32)
        h = jnp.where(y > 0, y, NEG_SLOPE * y)
    o_ref[...] = h.astype(o_ref.dtype)


@functools.partial(jax.jit, static_argnames=("block_m",))
def mlp_forward(x, weights_t, *, block_m=256):
    """Reproduces MLP.forward: x = leaky_relu(layer(x)) for each layer.

    x:          (batch, dims[0])
    weights_t:  list of transposed weights, weights_t[i] has shape
                (dims[i], dims[i+1])  (PyTorch weight (out,in) transposed).
    block_m:    batch tile (rows per grid step); must be a multiple of 8.
    """
    M, K0 = x.shape
    dims = [K0] + [w.shape[1] for w in weights_t]

    # Lane/sublane-dense padded sizes.
    dims_pad = [_round_up(d, _LANE) for d in dims]
    tm = min(block_m, _round_up(M, _SUBLANE))
    tm = _round_up(tm, _SUBLANE)
    M_pad = _round_up(M, tm)
    n_blocks = M_pad // tm

    # Zero-pad input and weights (zero rows/cols contribute nothing; the
    # padded output columns stay exactly 0 through every layer).
    x_pad = jnp.pad(x, ((0, M_pad - M), (0, dims_pad[0] - K0)))
    w_pads = []
    for i, w in enumerate(weights_t):
        k, n = w.shape
        w_pads.append(
            jnp.pad(w, ((0, dims_pad[i] - k), (0, dims_pad[i + 1] - n)))
        )

    # x / out move along the batch grid axis; every weight uses a constant
    # index_map (block (0, 0) for all steps) so it is fetched once and stays
    # resident in VMEM for the whole grid.
    in_specs = [pl.BlockSpec((tm, dims_pad[0]), lambda i: (i, 0))]
    for li in range(len(w_pads)):
        in_specs.append(
            pl.BlockSpec(
                (dims_pad[li], dims_pad[li + 1]), lambda i: (0, 0)
            )
        )
    out_specs = pl.BlockSpec((tm, dims_pad[-1]), lambda i: (i, 0))

    out_pad = pl.pallas_call(
        _fused_mlp_kernel,
        out_shape=jax.ShapeDtypeStruct((M_pad, dims_pad[-1]), x.dtype),
        grid=(n_blocks,),
        in_specs=in_specs,
        out_specs=out_specs,
        compiler_params=pltpu.CompilerParams(
            dimension_semantics=("parallel",),
        ),
    )(x_pad, *w_pads)

    # Slice back to the true (unpadded) output shape.
    return out_pad[:M, : dims[-1]]


# TODO(synk): for very wide layers (dims >> 1024) add a K/N-tiled inner loop
# (weights blocked over the reduction dim with a VMEM accumulator); the
# all-resident scheme here is the right choice for typical MLP widths.


def init_mlp_weights(key, dims, dtype=jnp.float32):
    """Deterministic init of bias-free Linear weights.

    PyTorch nn.Linear(dims[i-1], dims[i], bias=False) has weight shape
    (dims[i], dims[i-1]); we store the transpose (dims[i-1], dims[i])."""
    weights_t = []
    for i in range(1, len(dims)):
        key, sub = jax.random.split(key)
        fan_in = dims[i - 1]
        bound = 1.0 / (fan_in ** 0.5)  # kaiming_uniform-ish range, deterministic
        w = jax.random.uniform(
            sub, (dims[i], dims[i - 1]), dtype=dtype, minval=-bound, maxval=bound
        )
        weights_t.append(jnp.transpose(w))  # (in, out)
    return weights_t


if __name__ == "__main__":
    key = jax.random.PRNGKey(0)
    dims = [32, 64, 32]   # dims argument of MLP
    batch = 8

    k_x, k_w = jax.random.split(key)
    x = jax.random.normal(k_x, (batch, dims[0]), dtype=jnp.float32)
    weights_t = init_mlp_weights(k_w, dims)

    out = mlp_forward(x, weights_t)
    out = jax.block_until_ready(out)

    # sanity check against plain-JAX reference (unpadded math)
    ref = x
    for w_t in weights_t:
        y = ref @ w_t
        ref = jnp.where(y > 0, y, NEG_SLOPE * y)
    assert out.shape == (batch, dims[-1])
    assert jnp.allclose(out, ref, atol=1e-5, rtol=1e-5)

    print("KERNEL_OK")
</pallas_src>

<mosaic_0001>
module attributes {stable_mosaic.version = 11 : i64} {
  func.func @_fused_mlp_kernel(%arg0: i32, %arg1: memref<8x128xf32, #tpu.memory_space<vmem>>, %arg2: memref<128x128xf32, #tpu.memory_space<vmem>>, %arg3: memref<128x128xf32, #tpu.memory_space<vmem>>, %arg4: memref<8x128xf32, #tpu.memory_space<vmem>>) attributes {dimension_semantics = [#tpu.dimension_semantics<parallel>], iteration_bounds = array<i64: 1>, scalar_prefetch = 0 : i64, scratch_operands = 0 : i64, tpu.core_type = #tpu.core_type<tc>, window_params = [{transform_indices = @transform_0, window_bounds = array<i64: 8, 128>}, {pipeline_mode = #tpu.pipeline_mode<synchronous>, transform_indices = @transform_1, window_bounds = array<i64: 128, 128>}, {pipeline_mode = #tpu.pipeline_mode<synchronous>, transform_indices = @transform_2, window_bounds = array<i64: 128, 128>}, {transform_indices = @transform_3, window_bounds = array<i64: 8, 128>}]} {
    %c0 = arith.constant 0 : index
    %c0_0 = arith.constant 0 : index
    %0 = vector.load %arg1[%c0, %c0_0] : memref<8x128xf32, #tpu.memory_space<vmem>>, vector<8x128xf32>
    %c0_1 = arith.constant 0 : index
    %c0_2 = arith.constant 0 : index
    %1 = vector.load %arg2[%c0_1, %c0_2] : memref<128x128xf32, #tpu.memory_space<vmem>>, vector<128x128xf32>
    %cst = arith.constant dense<0.000000e+00> : vector<8x128xf32>
    %2 = tpu.matmul %0, %1, %cst {dimension_numbers = #tpu.dot_dimension_numbers<[1], [0], [0], [1], [0, 0, 1, 1], [], []>} : vector<8x128xf32>, vector<128x128xf32>, vector<8x128xf32> -> vector<8x128xf32>
    %cst_3 = arith.constant 0.000000e+00 : f32
    %3 = vector.broadcast %cst_3 : f32 to vector<8x128xf32>
    %4 = arith.cmpf ogt, %2, %3 : vector<8x128xf32>
    %cst_4 = arith.constant 0.00999999977 : f32
    %5 = vector.broadcast %cst_4 : f32 to vector<8x128xf32>
    %6 = arith.mulf %5, %2 : vector<8x128xf32>
    %7 = arith.select %4, %2, %6 : vector<8x128xi1>, vector<8x128xf32>
    %c0_5 = arith.constant 0 : index
    %c0_6 = arith.constant 0 : index
    %8 = vector.load %arg3[%c0_5, %c0_6] : memref<128x128xf32, #tpu.memory_space<vmem>>, vector<128x128xf32>
    %cst_7 = arith.constant dense<0.000000e+00> : vector<8x128xf32>
    %9 = tpu.matmul %7, %8, %cst_7 {dimension_numbers = #tpu.dot_dimension_numbers<[1], [0], [0], [1], [0, 0, 1, 1], [], []>} : vector<8x128xf32>, vector<128x128xf32>, vector<8x128xf32> -> vector<8x128xf32>
    %cst_8 = arith.constant 0.000000e+00 : f32
    %10 = vector.broadcast %cst_8 : f32 to vector<8x128xf32>
    %11 = arith.cmpf ogt, %9, %10 : vector<8x128xf32>
    %cst_9 = arith.constant 0.00999999977 : f32
    %12 = vector.broadcast %cst_9 : f32 to vector<8x128xf32>
    %13 = arith.mulf %12, %9 : vector<8x128xf32>
    %14 = arith.select %11, %9, %13 : vector<8x128xi1>, vector<8x128xf32>
    %c0_10 = arith.constant 0 : index
    %c0_11 = arith.constant 0 : index
    %15 = vector.load %arg4[%c0_10, %c0_11] : memref<8x128xf32, #tpu.memory_space<vmem>>, vector<8x128xf32>
    tpu.vector_store %arg4[%c0_10, %c0_11], %14 {strides = array<i32>} : memref<8x128xf32, #tpu.memory_space<vmem>>, vector<8x128xf32>,
    return
  }
  func.func @transform_0(%arg0: i32) -> (i32, i32) {
    %c0_i32 = arith.constant 0 : i32
    %c0_i32_0 = arith.constant 0 : i32
    return %arg0, %c0_i32 : i32, i32
  }
  func.func @transform_1(%arg0: i32) -> (i32, i32) {
    %c0_i32 = arith.constant 0 : i32
    %c0_i32_0 = arith.constant 0 : i32
    %c0_i32_1 = arith.constant 0 : i32
    return %c0_i32, %c0_i32_0 : i32, i32
  }
  func.func @transform_2(%arg0: i32) -> (i32, i32) {
    %c0_i32 = arith.constant 0 : i32
    %c0_i32_0 = arith.constant 0 : i32
    %c0_i32_1 = arith.constant 0 : i32
    return %c0_i32, %c0_i32_0 : i32, i32
  }
  func.func @transform_3(%arg0: i32) -> (i32, i32) {
    %c0_i32 = arith.constant 0 : i32
    %c0_i32_0 = arith.constant 0 : i32
    return %arg0, %c0_i32 : i32, i32
  }
}

</mosaic_0001>

<llo_original>
// kernel: mlp_forward.1
$region0: #{mlp_forward.1}
  #allocation0 [shape = 'u32[]', space=smem, size = 0x4, offset = 0x4, fixed_abs, tag = 'smem constant byte address 0x4 - core index']
  #allocation1 [shape = 'u32[144,128]{1,0:T(1,128)}', space=vmem, size = 0x12000, scoped, tag = 'internal scratch']
  %s0 = inlined_call_operand.vmem [shape: f32[8,128], index: 0, kind: input, shape index: {}]
  %s1 = inlined_call_operand.vmem [shape: f32[128,128], index: 1, kind: input, shape index: {}]
  %s2 = inlined_call_operand.vmem [shape: f32[128,128], index: 2, kind: input, shape index: {}]
  %s3 = inlined_call_operand.hbm [shape: f32[8,128], index: 3, kind: output, shape index: {}]
  %s4 = sld [smem:[#allocation0]]
  $region22: #{mlp_forward.1} parent=0
    _
  %s6 = ssub.s32 1, %s4
  %s7 = scalar_select 0, %s6, %s4
  $region1: #{mlp_forward.1} parent=0
    #allocation2 [shape = 'u8[4096]{0}', space=vmem, size = 0x1000, scoped, tag = 'output window, operand 0, single buffered']
    #allocation3 [shape = 's32[1]{0}', space=sflag, size = 0x4, scoped, tag = 'scoped memory for mlp_forward.1']
    %8 = vsyncpa [#allocation3], 0
    // Predicated region
    $region2: #{mlp_forward.1} parent=1 // pred_check
      _
    $region3: #{mlp_forward.1} parent=1 // pred_check_branch
      %10 = sbr.rel (0) target = $region5
    $region4: #{mlp_forward.1} parent=1 // pred_region
      _
    $region5: #{mlp_forward.1} parent=1 // pred_fallthru
      _
    // Predicated region
    $region6: #{mlp_forward.1} parent=1 // pred_check
      _
    $region7: #{mlp_forward.1} parent=1 // pred_check_branch
      %12 = sbr.rel (0) target = $region9
    $region8: #{mlp_forward.1} parent=1 // pred_region
      _
    $region9: #{mlp_forward.1} parent=1 // pred_fallthru
      _
    // Predicated region
    $region10: #{mlp_forward.1} parent=1 // pred_check
      _
    $region11: #{mlp_forward.1} parent=1 // pred_check_branch
      %14 = sbr.rel (0) target = $region13
    $region12: #{mlp_forward.1} parent=1 // pred_region
      _
    $region13: #{mlp_forward.1} parent=1 // pred_fallthru
      _
    %v15 = vld [vmem:[%s0] sm:$0xff]
    %v16 = vld [vmem:[%s1] sm:$0xff]
    %v17 = vld [vmem:[%s1 + $0x8] sm:$0xff]
    %v18 = vld [vmem:[%s1 + $0x10] sm:$0xff]
    %v19 = vld [vmem:[%s1 + $0x18] sm:$0xff]
    %v20 = vld [vmem:[%s1 + $0x20] sm:$0xff]
    %v21 = vld [vmem:[%s1 + $0x28] sm:$0xff]
    %v22 = vld [vmem:[%s1 + $0x30] sm:$0xff]
    %v23 = vld [vmem:[%s1 + $0x38] sm:$0xff]
    %v24 = vld [vmem:[%s1 + $0x40] sm:$0xff]
    %v25 = vld [vmem:[%s1 + $0x48] sm:$0xff]
    %v26 = vld [vmem:[%s1 + $0x50] sm:$0xff]
    %v27 = vld [vmem:[%s1 + $0x58] sm:$0xff]
    %v28 = vld [vmem:[%s1 + $0x60] sm:$0xff]
    %v29 = vld [vmem:[%s1 + $0x68] sm:$0xff]
    %v30 = vld [vmem:[%s1 + $0x70] sm:$0xff]
    %v31 = vld [vmem:[%s1 + $0x78] sm:$0xff]
    %32 = vmatprep.subr.mxu0 0.0
    %33 = vmatpush1.msra.mxu0 %v16
    %34 = vmatprep.subr.mxu0 0.0
    %35 = vmatpush1.msra.mxu0 %v17
    %36 = vmatprep.subr.mxu0 0.0
    %37 = vmatpush1.msra.mxu0 %v18
    %38 = vmatprep.subr.mxu0 0.0
    %39 = vmatpush1.msra.mxu0 %v19
    %40 = vmatprep.subr.mxu0 0.0
    %41 = vmatpush1.msra.mxu0 %v20
    %42 = vmatprep.subr.mxu0 0.0
    %43 = vmatpush1.msra.mxu0 %v21
    %44 = vmatprep.subr.mxu0 0.0
    %45 = vmatpush1.msra.mxu0 %v22
    %46 = vmatprep.subr.mxu0 0.0
    %47 = vmatpush1.msra.mxu0 %v23
    %48 = vmatprep.subr.mxu0 0.0
    %49 = vmatpush1.msra.mxu0 %v24
    %50 = vmatprep.subr.mxu0 0.0
    %51 = vmatpush1.msra.mxu0 %v25
    %52 = vmatprep.subr.mxu0 0.0
    %53 = vmatpush1.msra.mxu0 %v26
    %54 = vmatprep.subr.mxu0 0.0
    %55 = vmatpush1.msra.mxu0 %v27
    %56 = vmatprep.subr.mxu0 0.0
    %57 = vmatpush1.msra.mxu0 %v28
    %58 = vmatprep.subr.mxu0 0.0
    %59 = vmatpush1.msra.mxu0 %v29
    %60 = vmatprep.subr.mxu0 0.0
    %61 = vmatpush1.msra.mxu0 %v30
    %62 = vmatprep.subr.mxu0 0.0
    %63 = vmatpush1.msra.mxu0 %v31
    %64 = vmatprep.subr.mxu0 0.0
    %65 = vmatpush1.msra.mxu0 0.0
    %66 = vmatprep.subr.mxu0 0.0
    %67 = vmatpush1.msra.mxu0 0.0
    %68 = vmatprep.subr.mxu0 0.0
    %69 = vmatpush1.msra.mxu0 0.0
    %70 = vmatprep.subr.mxu0 0.0
    %71 = vmatpush1.msra.mxu0 0.0
    %72 = vmatprep.subr.mxu0 0.0
    %73 = vmatpush1.msra.mxu0 0.0
    %74 = vmatprep.subr.mxu0 0.0
    %75 = vmatpush1.msra.mxu0 0.0
    %76 = vmatprep.subr.mxu0 0.0
    %77 = vmatpush1.msra.mxu0 0.0
    %78 = vmatprep.subr.mxu0 0.0
    %79 = vmatpush1.msra.mxu0 0.0
    %80 = vmatprep.subr.mxu0 0.0
    %81 = vmatpush1.msra.mxu0 0.0
    %82 = vmatprep.subr.mxu0 0.0
    %83 = vmatpush1.msra.mxu0 0.0
    %84 = vmatprep.subr.mxu0 0.0
    %85 = vmatpush1.msra.mxu0 0.0
    %86 = vmatprep.subr.mxu0 0.0
    %87 = vmatpush1.msra.mxu0 0.0
    %88 = vmatprep.subr.mxu0 0.0
    %89 = vmatpush1.msra.mxu0 0.0
    %90 = vmatprep.subr.mxu0 0.0
    %91 = vmatpush1.msra.mxu0 0.0
    %92 = vmatprep.subr.mxu0 0.0
    %93 = vmatpush1.msra.mxu0 0.0
    %94 = vmatprep.subr.mxu0 0.0
    %95 = vmatpush1.msra.mxu0 0.0
    %96 = vmatprep.mubr.f32.mxu0 0.0
    %97 = vmatmul.mubr.f32.gmra.mrb[0].mxu0 %v15
    %v98 = vpop.f32.mrb[0].mxu0
    %v99 = vadd.f32 0.0, %v98
    %v100 = vpop.f32.mrb[0].mxu0
    %101 = vdwg.mxu0
    %vm102 = vcmp.gt.f32.partialorder %v99, 0.0
    %v103 = vmul.f32 %v99, 0.01
    %v104 = vsel %vm102, %v99, %v103
    %v105 = vld [vmem:[%s2] sm:$0xff]
    %v106 = vld [vmem:[%s2 + $0x8] sm:$0xff]
    %v107 = vld [vmem:[%s2 + $0x10] sm:$0xff]
    %v108 = vld [vmem:[%s2 + $0x18] sm:$0xff]
    %v109 = vld [vmem:[%s2 + $0x20] sm:$0xff]
    %v110 = vld [vmem:[%s2 + $0x28] sm:$0xff]
    %v111 = vld [vmem:[%s2 + $0x30] sm:$0xff]
    %v112 = vld [vmem:[%s2 + $0x38] sm:$0xff]
    %v113 = vld [vmem:[%s2 + $0x40] sm:$0xff]
    %v114 = vld [vmem:[%s2 + $0x48] sm:$0xff]
    %v115 = vld [vmem:[%s2 + $0x50] sm:$0xff]
    %v116 = vld [vmem:[%s2 + $0x58] sm:$0xff]
    %v117 = vld [vmem:[%s2 + $0x60] sm:$0xff]
    %v118 = vld [vmem:[%s2 + $0x68] sm:$0xff]
    %v119 = vld [vmem:[%s2 + $0x70] sm:$0xff]
    %v120 = vld [vmem:[%s2 + $0x78] sm:$0xff]
    %121 = vmatprep.subr.mxu0 0.0
    %122 = vmatpush1.msra.mxu0 %v105
    %123 = vmatprep.subr.mxu0 0.0
    %124 = vmatpush1.msra.mxu0 %v106
    %125 = vmatprep.subr.mxu0 0.0
    %126 = vmatpush1.msra.mxu0 %v107
    %127 = vmatprep.subr.mxu0 0.0
    %128 = vmatpush1.msra.mxu0 %v108
    %129 = vmatprep.subr.mxu0 0.0
    %130 = vmatpush1.msra.mxu0 %v109
    %131 = vmatprep.subr.mxu0 0.0
    %132 = vmatpush1.msra.mxu0 %v110
    %133 = vmatprep.subr.mxu0 0.0
    %134 = vmatpush1.msra.mxu0 %v111
    %135 = vmatprep.subr.mxu0 0.0
    %136 = vmatpush1.msra.mxu0 %v112
    %137 = vmatprep.subr.mxu0 0.0
    %138 = vmatpush1.msra.mxu0 %v113
    %139 = vmatprep.subr.mxu0 0.0
    %140 = vmatpush1.msra.mxu0 %v114
    %141 = vmatprep.subr.mxu0 0.0
    %142 = vmatpush1.msra.mxu0 %v115
    %143 = vmatprep.subr.mxu0 0.0
    %144 = vmatpush1.msra.mxu0 %v116
    %145 = vmatprep.subr.mxu0 0.0
    %146 = vmatpush1.msra.mxu0 %v117
    %147 = vmatprep.subr.mxu0 0.0
    %148 = vmatpush1.msra.mxu0 %v118
    %149 = vmatprep.subr.mxu0 0.0
    %150 = vmatpush1.msra.mxu0 %v119
    %151 = vmatprep.subr.mxu0 0.0
    %152 = vmatpush1.msra.mxu0 %v120
    %153 = vmatprep.subr.mxu0 0.0
    %154 = vmatpush1.msra.mxu0 0.0
    %155 = vmatprep.subr.mxu0 0.0
    %156 = vmatpush1.msra.mxu0 0.0
    %157 = vmatprep.subr.mxu0 0.0
    %158 = vmatpush1.msra.mxu0 0.0
    %159 = vmatprep.subr.mxu0 0.0
    %160 = vmatpush1.msra.mxu0 0.0
    %161 = vmatprep.subr.mxu0 0.0
    %162 = vmatpush1.msra.mxu0 0.0
    %163 = vmatprep.subr.mxu0 0.0
    %164 = vmatpush1.msra.mxu0 0.0
    %165 = vmatprep.subr.mxu0 0.0
    %166 = vmatpush1.msra.mxu0 0.0
    %167 = vmatprep.subr.mxu0 0.0
    %168 = vmatpush1.msra.mxu0 0.0
    %169 = vmatprep.subr.mxu0 0.0
    %170 = vmatpush1.msra.mxu0 0.0
    %171 = vmatprep.subr.mxu0 0.0
    %172 = vmatpush1.msra.mxu0 0.0
    %173 = vmatprep.subr.mxu0 0.0
    %174 = vmatpush1.msra.mxu0 0.0
    %175 = vmatprep.subr.mxu0 0.0
    %176 = vmatpush1.msra.mxu0 0.0
    %177 = vmatprep.subr.mxu0 0.0
    %178 = vmatpush1.msra.mxu0 0.0
    %179 = vmatprep.subr.mxu0 0.0
    %180 = vmatpush1.msra.mxu0 0.0
    %181 = vmatprep.subr.mxu0 0.0
    %182 = vmatpush1.msra.mxu0 0.0
    %183 = vmatprep.subr.mxu0 0.0
    %184 = vmatpush1.msra.mxu0 0.0
    %185 = vmatprep.mubr.f32.mxu0 0.0
    %186 = vmatmul.mubr.f32.gmra.mrb[0].mxu0 %v104
    %v187 = vpop.f32.mrb[0].mxu0
    %v188 = vadd.f32 0.0, %v187
    %v189 = vpop.f32.mrb[0].mxu0
    %190 = vdwg.mxu0
    %vm191 = vcmp.gt.f32.partialorder %v188, 0.0
    %v192 = vmul.f32 %v188, 0.01
    %v193 = vsel %vm191, %v188, %v192
    %194 = vst [vmem:[#allocation2] sm:$0xff] %v193
    // Predicated region
    $region14: #{mlp_forward.1} parent=1 // pred_check
      _
    $region15: #{mlp_forward.1} parent=1 // pred_check_branch
      %196 = sbr.rel (0) target = $region17
    $region16: #{mlp_forward.1} parent=1 // pred_region
      %s198 = ssub.s32 128, 128
      %199 = vsyncadd [#allocation3], %s198
      %s201 = sshll.u32 [#allocation2], 4
      %s202 = int_to_ptr.vmem [resolvable:$true] %s201
      %204 = dma.vmem_to_hbm [thread:$0]  %s202, 128, %s3, [#allocation3]
    $region17: #{mlp_forward.1} parent=1 // pred_fallthru
      _
    // Predicated region
    $region18: #{mlp_forward.1} parent=1 // pred_check
      _
    $region19: #{mlp_forward.1} parent=1 // pred_check_branch
      %206 = sbr.rel (0) target = $region21
    $region20: #{mlp_forward.1} parent=1 // pred_region
      %207 = dma.done [#allocation3], 128
    $region21: #{mlp_forward.1} parent=1 // pred_fallthru
      _
    %208 = vsyncpa [#allocation3], 1

</llo_original>
